<compile_context>
chip_gen: v5e
topology: v5e:2x2
jax: 0.10.0
libtpu: 0.0.40
codegen_flags: <defaults>
</compile_context>

<pallas_src>
import jax
import jax.numpy as jnp
from jax.experimental import pallas as pl
from jax.experimental.pallas import tpu as pltpu

_LANES = 128      # vreg lane width (fast axis)
_SUBLANES = 8     # f32 vreg sublane depth
_MAX_TM = 1024    # sublane rows per tile: 1024*128*4B = 512 KiB (f32) per tile
                  # -> ~2 MiB double-buffered in+out; safe on v5e/v6e/v7x VMEM


def _identity_kernel(x_ref, o_ref):
    # Straight tile copy; the output HBM buffer aliases the input buffer.
    o_ref[...] = x_ref[...]


def identity(x: jax.Array) -> jax.Array:
    """Pallas implementation of Identity.forward(x) -> x (any shape/dtype)."""
    if x.size == 0:
        return x

    orig_shape = x.shape
    n = x.size
    flat = x.reshape(-1)

    # Lane-dense view: pad up to a multiple of 8*128 so the slab is
    # (rows, 128) with rows a multiple of 8 (unmasked full-width stores).
    min_chunk = _SUBLANES * _LANES
    padded_n = n + (-n) % min_chunk
    rows = padded_n // _LANES

    if rows > _MAX_TM:
        # Pad rows to a multiple of the tile so the grid divides evenly
        # (no partial blocks); costs at most ~512 KiB of extra traffic.
        extra_rows = (-rows) % _MAX_TM
        rows += extra_rows
        padded_n += extra_rows * _LANES
        tm = _MAX_TM          # multiple of 32 -> packs cleanly for bf16/int8/fp8
    else:
        tm = rows             # small array: single full-extent block

    if padded_n != n:
        flat = jnp.pad(flat, (0, padded_n - n))
    x2d = flat.reshape(rows, _LANES)
    grid = rows // tm

    out2d = pl.pallas_call(
        _identity_kernel,
        out_shape=jax.ShapeDtypeStruct((rows, _LANES), x2d.dtype),
        grid_spec=pltpu.PrefetchScalarGridSpec(
            num_scalar_prefetch=0,
            grid=(grid,),
            in_specs=[pl.BlockSpec((tm, _LANES), lambda i: (i, 0))],
            out_specs=pl.BlockSpec((tm, _LANES), lambda i: (i, 0)),
        ),
        # Output aliases the input HBM buffer: no HBM->VMEM->new-HBM round
        # trip to a fresh allocation; effectively free when input is donated.
        input_output_aliases={0: 0},
        compiler_params=pltpu.CompilerParams(
            # "parallel" lets the grid shard across both TCs / DMA engines on v7x.
            dimension_semantics=("parallel",),
        ),
    )(x2d)

    out = out2d.reshape(-1)
    if padded_n != n:
        out = out[:n]
    return out.reshape(orig_shape)


if __name__ == "__main__":
    key = jax.random.PRNGKey(0)
    k0, k1, k2 = jax.random.split(key, 3)

    # Primary case: NCHW input, as the PyTorch module would see.
    x = jax.random.normal(k0, (2, 4, 16, 16), dtype=jnp.float32)
    y = identity(x)
    jax.block_until_ready(y)
    assert y.shape == x.shape and y.dtype == x.dtype
    assert bool(jnp.array_equal(y, x)), "identity output differs (NCHW f32)"

    # Ragged (size not a multiple of 128) + sub-32-bit dtype.
    xr = jax.random.normal(k1, (3, 5, 7), dtype=jnp.bfloat16)
    yr = identity(xr)
    jax.block_until_ready(yr)
    assert yr.shape == xr.shape and yr.dtype == xr.dtype
    assert bool(jnp.array_equal(yr, xr)), "identity output differs (ragged bf16)"

    # Multi-tile path (rows > tile) to exercise the pipelined parallel grid.
    xl = jax.random.normal(k2, (2, 4, 132, 132), dtype=jnp.float32)
    yl = identity(xl)
    jax.block_until_ready(yl)
    assert yl.shape == xl.shape and yl.dtype == xl.dtype
    assert bool(jnp.array_equal(yl, xl)), "identity output differs (multi-tile)"

    print("KERNEL_OK")
</pallas_src>

<mosaic_0001>
module attributes {stable_mosaic.version = 11 : i64} {
  func.func @_identity_kernel(%arg0: i32, %arg1: memref<16x128xf32, #tpu.memory_space<vmem>>, %arg2: memref<16x128xf32, #tpu.memory_space<vmem>>) attributes {dimension_semantics = [#tpu.dimension_semantics<parallel>], iteration_bounds = array<i64: 1>, scalar_prefetch = 0 : i64, scratch_operands = 0 : i64, tpu.core_type = #tpu.core_type<tc>, window_params = [{transform_indices = @transform_0, window_bounds = array<i64: 16, 128>}, {transform_indices = @transform_1, window_bounds = array<i64: 16, 128>}]} {
    %c0 = arith.constant 0 : index
    %c0_0 = arith.constant 0 : index
    %0 = vector.load %arg1[%c0, %c0_0] : memref<16x128xf32, #tpu.memory_space<vmem>>, vector<16x128xf32>
    %c0_1 = arith.constant 0 : index
    %c0_2 = arith.constant 0 : index
    %1 = vector.load %arg2[%c0_1, %c0_2] : memref<16x128xf32, #tpu.memory_space<vmem>>, vector<16x128xf32>
    tpu.vector_store %arg2[%c0_1, %c0_2], %0 {strides = array<i32>} : memref<16x128xf32, #tpu.memory_space<vmem>>, vector<16x128xf32>,
    return
  }
  func.func @transform_0(%arg0: i32) -> (i32, i32) {
    %c0_i32 = arith.constant 0 : i32
    %c0_i32_0 = arith.constant 0 : i32
    return %arg0, %c0_i32 : i32, i32
  }
  func.func @transform_1(%arg0: i32) -> (i32, i32) {
    %c0_i32 = arith.constant 0 : i32
    %c0_i32_0 = arith.constant 0 : i32
    return %arg0, %c0_i32 : i32, i32
  }
}

</mosaic_0001>

<llo_original>
// kernel: tpu_custom_call.1
$region0: #{tpu_custom_call.1}
  #allocation0 [shape = 'u32[]', space=smem, size = 0x4, offset = 0x4, fixed_abs, tag = 'smem constant byte address 0x4 - core index']
  #allocation1 [shape = 'u32[72,128]{1,0:T(1,128)}', space=vmem, size = 0x9000, scoped, tag = 'internal scratch']
  %s0 = inlined_call_operand.hbm [shape: f32[16,128], index: 0, kind: input, shape index: {}, may-alias: {0,1}]
  %s1 = inlined_call_operand.hbm [shape: f32[16,128], index: 1, kind: output, shape index: {}, may-alias: {0,1}]
  %s2 = sld [smem:[#allocation0]]
  $region18: #{tpu_custom_call.1} parent=0
    _
  %s4 = ssub.s32 1, %s2
  %s5 = scalar_select 0, %s4, %s2
  $region1: #{tpu_custom_call.1} parent=0
    #allocation2 [shape = 'u8[8192]{0}', space=vmem, size = 0x2000, scoped, tag = 'input window, operand 0, single buffered']
    #allocation3 [shape = 's32[1]{0}', space=sflag, size = 0x4, scoped, tag = 'scoped memory for tpu_custom_call.1']
    #allocation4 [shape = 's32[1]{0}', space=sflag, size = 0x4, scoped, tag = 'scoped memory for tpu_custom_call.1']
    #allocation5 [shape = 'u8[8192]{0}', space=vmem, size = 0x2000, scoped, tag = 'output window, operand 0, single buffered']
    %6 = vsyncpa [#allocation3], 0
    %7 = vsyncpa [#allocation4], 0
    // Predicated region
    $region2: #{tpu_custom_call.1} parent=1 // pred_check
      _
    $region3: #{tpu_custom_call.1} parent=1 // pred_check_branch
      %9 = sbr.rel (0) target = $region5
    $region4: #{tpu_custom_call.1} parent=1 // pred_region
      %11 = vsyncadd [#allocation3], 0
      %s12 = sshll.u32 %s0, 4
      %s13 = int_to_ptr.hbm [resolvable:$true] %s12
      %s14 = sshll.u32 [#allocation2], 4
      %s15 = int_to_ptr.vmem [resolvable:$true] %s14
      %20 = dma.hbm_to_vmem [thread:$0]  %s13, 256, %s15, [#allocation3], 128, 128, 8
    $region5: #{tpu_custom_call.1} parent=1 // pred_fallthru
      _
    // Predicated region
    $region6: #{tpu_custom_call.1} parent=1 // pred_check
      _
    $region7: #{tpu_custom_call.1} parent=1 // pred_check_branch
      %22 = sbr.rel (0) target = $region9
    $region8: #{tpu_custom_call.1} parent=1 // pred_region
      %24 = dma.done [#allocation3], 256
    $region9: #{tpu_custom_call.1} parent=1 // pred_fallthru
      _
    %v25 = vld [vmem:[#allocation2] sm:$0xff]
    %v26 = vld [vmem:[#allocation2 + $0x8] sm:$0xff]
    %27 = vst [vmem:[#allocation5] sm:$0xff] %v25
    %28 = vst [vmem:[#allocation5 + $0x8] sm:$0xff] %v26
    // Predicated region
    $region10: #{tpu_custom_call.1} parent=1 // pred_check
      _
    $region11: #{tpu_custom_call.1} parent=1 // pred_check_branch
      %30 = sbr.rel (0) target = $region13
    $region12: #{tpu_custom_call.1} parent=1 // pred_region
      %32 = vsyncadd [#allocation4], 0
      %s33 = sshll.u32 [#allocation5], 4
      %s34 = int_to_ptr.vmem [resolvable:$true] %s33
      %s35 = sshll.u32 %s1, 4
      %s36 = int_to_ptr.hbm [resolvable:$true] %s35
      %41 = dma.vmem_to_hbm [thread:$0]  %s34, 256, %s36, [#allocation4], 128, 128, 8
    $region13: #{tpu_custom_call.1} parent=1 // pred_fallthru
      _
    // Predicated region
    $region14: #{tpu_custom_call.1} parent=1 // pred_check
      _
    $region15: #{tpu_custom_call.1} parent=1 // pred_check_branch
      %43 = sbr.rel (0) target = $region17
    $region16: #{tpu_custom_call.1} parent=1 // pred_region
      %45 = dma.done [#allocation4], 256
    $region17: #{tpu_custom_call.1} parent=1 // pred_fallthru
      _
    %46 = vsyncpa [#allocation3], 1
    %47 = vsyncpa [#allocation4], 1

</llo_original>
